<compile_context>
chip_gen: v7x
topology: tpu7x:2x2x1
jax: 0.10.0
libtpu: 0.0.40
codegen_flags: <defaults>
</compile_context>

<pallas_src>
import functools

import jax
import jax.numpy as jnp
from jax.experimental import pallas as pl
from jax.experimental.pallas import tpu as pltpu

_LANE = 128


def _ceil_div(a, b):
    return -(-a // b)


@functools.lru_cache(maxsize=1)
def _tpu_budget():
    """(block_bytes, vmem_limit_bytes) picked from the chip's VMEM capacity."""
    try:
        vmem = getattr(pltpu.get_tpu_info(), "vmem_capacity_bytes", None)
    except Exception:  # interpret mode / older jax -> conservative defaults
        vmem = None
    if vmem is not None and vmem <= 80 * 1024 * 1024:
        # v7x-class (64 MiB VMEM, ~3.2 TB/s HBM per TC): larger blocks keep the
        # ~0.35 us per-grid-step overhead <10%; 4 buffers * 6 MiB = 24 MiB sits
        # well inside the raised 40 MiB scoped-VMEM limit.
        return 6 * 1024 * 1024, 40 * 1024 * 1024
    # v5e / v6e (128 MiB physical VMEM, slower HBM): 2 MiB blocks; the
    # 4 * 2 MiB = 8 MiB working set fits even v5e's 16 MiB default scoped VMEM.
    return 2 * 1024 * 1024, None


def _make_mish_kernel(out_dtype):
    use_approx_rcp = jnp.dtype(out_dtype) == jnp.bfloat16

    def _mish_kernel(x_ref, o_ref):
        xf = x_ref[...].astype(jnp.float32)
        # tanh(softplus(x)) = ((1+e^x)^2 - 1) / ((1+e^x)^2 + 1) = n / (n + 2),
        # n = t*(t+2), t = exp(x).  Clamping at PyTorch's softplus threshold
        # (20) keeps t finite; at x = 20, n/(n+2) already rounds to exactly
        # 1.0f, so mish == x there and no explicit linear-branch select is
        # needed (1 EUP exp + 1 divide instead of exp + log1p + tanh).
        t = jnp.exp(jnp.minimum(xf, 20.0))
        n = t * (t + 2.0)
        denom = n + 2.0
        if use_approx_rcp:
            # EUP approx reciprocal (rel. error ~2^-12 << bf16 ulp) keeps the
            # kernel memory-bound on v7x with bf16 I/O.
            mish = xf * n * pl.reciprocal(denom, approx=True)
        else:
            mish = xf * n / denom
        o_ref[...] = mish.astype(o_ref.dtype)

    return _mish_kernel


def _elementwise_call(x2, block_shape, grid, vmem_limit_bytes):
    return pl.pallas_call(
        _make_mish_kernel(x2.dtype),
        out_shape=jax.ShapeDtypeStruct(x2.shape, x2.dtype),
        grid=grid,
        in_specs=[pl.BlockSpec(block_shape, lambda i: (i, 0))],
        out_specs=pl.BlockSpec(block_shape, lambda i: (i, 0)),
        input_output_aliases={0: 0},
        compiler_params=pltpu.CompilerParams(
            dimension_semantics=("parallel",),
            vmem_limit_bytes=vmem_limit_bytes,
        ),
    )(x2)


def _tiled_call(x2, itemsize, block_bytes, vmem_limit_bytes):
    rows, lanes = x2.shape
    # VMEM footprint per row uses the lane-PADDED width (last dim rounds up to
    # 128 lanes in vregs/VMEM); that is what counts against the scoped-VMEM
    # budget, not the nominal `lanes`.
    padded_row_bytes = _ceil_div(lanes, _LANE) * _LANE * itemsize
    block_rows = max(8, (block_bytes // padded_row_bytes) // 8 * 8)
    # Keep >=2 grid steps (even split preferred) for inputs above ~1 MiB so the
    # "parallel" axis can shard across v7x's two TensorCores.
    if rows * padded_row_bytes > (1 << 20):
        half_rows = _ceil_div(_ceil_div(rows, 2), 8) * 8
        block_rows = min(block_rows, half_rows)
    if block_rows >= rows:
        block_rows = rows  # single block == full extent (always legal)
    grid = (_ceil_div(rows, block_rows),)
    return _elementwise_call(x2, (block_rows, lanes), grid, vmem_limit_bytes)


def minkowski_mish(feats: jax.Array) -> jax.Array:
    """Apply Mish elementwise to the (N, C) feature matrix of a sparse tensor."""
    assert feats.ndim == 2, "expected (N_points, C) feature matrix"
    n, c = feats.shape
    total = n * c
    if total == 0:
        return feats

    itemsize = jnp.dtype(feats.dtype).itemsize
    block_bytes, vmem_limit_bytes = _tpu_budget()

    # Primary path: fully lane-dense slab.  Row-major reshape of the flat
    # element stream to (rows, lanes) with lanes the largest multiple of 128
    # (<=1024) dividing the element count -- pure layout plumbing for an
    # elementwise op; vregs and stores are 128/128 lane-populated.
    for cand in (1024, 512, 256, 128):
        if total % cand == 0:
            rows = total // cand
            out2 = _tiled_call(
                feats.reshape(rows, cand), itemsize, block_bytes, vmem_limit_bytes
            )
            return out2.reshape(n, c)

    # Fallback (element count not a multiple of 128): fold as many rows as
    # possible into the lane axis, (n, c) -> (n // k, k * c) with k*c <= 1024,
    # so the 128-lane padding wastes at most ~127/(k*c) of each vreg instead
    # of (128 - c)/128.  Still no host-side pad/slice; the ragged edge block
    # along rows is masked by Pallas.
    k = 1
    if c < 1024:
        for cand in range(min(n, 1024 // c), 1, -1):
            if n % cand == 0:
                k = cand
                break
    rows, lanes = n // k, k * c
    out2 = _tiled_call(
        feats.reshape(rows, lanes), itemsize, block_bytes, vmem_limit_bytes
    )
    return out2.reshape(n, c)


def _mish_ref(x):
    """Pure-JAX reference matching PyTorch tanh(softplus(x)) * x."""
    xf = x.astype(jnp.float32)
    sp = jnp.where(xf > 20.0, xf, jnp.log1p(jnp.exp(jnp.minimum(xf, 20.0))))
    return (jnp.tanh(sp) * xf).astype(x.dtype)


if __name__ == "__main__":
    key = jax.random.PRNGKey(0)
    # Small sparse-tensor-like feature matrix: 300 active points, 32 channels.
    n_points, channels = 300, 32
    feats = jax.random.normal(key, (n_points, channels), dtype=jnp.float32) * 5.0

    ref = _mish_ref(feats)
    out = jax.block_until_ready(minkowski_mish(feats))

    assert out.shape == feats.shape and out.dtype == feats.dtype
    assert jnp.allclose(out, ref, atol=1e-5, rtol=1e-4), float(
        jnp.max(jnp.abs(out - ref))
    )

    # Also exercise the ragged fallback path (N*C not a multiple of 128).
    feats2 = jax.random.normal(jax.random.PRNGKey(1), (37, 5), jnp.float32) * 5.0
    out2 = jax.block_until_ready(minkowski_mish(feats2))
    assert jnp.allclose(out2, _mish_ref(feats2), atol=1e-5, rtol=1e-4)

    print("KERNEL_OK")
</pallas_src>

<mosaic_0001>
module attributes {stable_mosaic.version = 11 : i64} {
  func.func @_mish_kernel(%arg0: i32, %arg1: memref<75x128xf32, #tpu.memory_space<vmem>>, %arg2: memref<75x128xf32, #tpu.memory_space<vmem>>) attributes {dimension_semantics = [#tpu.dimension_semantics<parallel>], iteration_bounds = array<i64: 1>, scalar_prefetch = 0 : i64, scratch_operands = 0 : i64, tpu.core_type = #tpu.core_type<tc>, window_params = [{transform_indices = @transform_0, window_bounds = array<i64: 75, 128>}, {transform_indices = @transform_1, window_bounds = array<i64: 75, 128>}]} {
    %c0 = arith.constant 0 : index
    %c0_0 = arith.constant 0 : index
    %0 = vector.load %arg1[%c0, %c0_0] : memref<75x128xf32, #tpu.memory_space<vmem>>, vector<75x128xf32>
    %cst = arith.constant 2.000000e+01 : f32
    %1 = vector.broadcast %cst : f32 to vector<75x128xf32>
    %2 = arith.minimumf %0, %1 : vector<75x128xf32>
    %3 = math.exp %2 : vector<75x128xf32>
    %cst_1 = arith.constant 2.000000e+00 : f32
    %4 = vector.broadcast %cst_1 : f32 to vector<75x128xf32>
    %5 = arith.addf %3, %4 : vector<75x128xf32>
    %6 = arith.mulf %3, %5 : vector<75x128xf32>
    %cst_2 = arith.constant 2.000000e+00 : f32
    %7 = vector.broadcast %cst_2 : f32 to vector<75x128xf32>
    %8 = arith.addf %6, %7 : vector<75x128xf32>
    %9 = arith.mulf %0, %6 : vector<75x128xf32>
    %10 = arith.divf %9, %8 : vector<75x128xf32>
    %c0_3 = arith.constant 0 : index
    %c0_4 = arith.constant 0 : index
    %11 = vector.load %arg2[%c0_3, %c0_4] : memref<75x128xf32, #tpu.memory_space<vmem>>, vector<75x128xf32>
    tpu.vector_store %arg2[%c0_3, %c0_4], %10 {strides = array<i32>} : memref<75x128xf32, #tpu.memory_space<vmem>>, vector<75x128xf32>,
    return
  }
  func.func @transform_0(%arg0: i32) -> (i32, i32) {
    %c0_i32 = arith.constant 0 : i32
    %c0_i32_0 = arith.constant 0 : i32
    return %arg0, %c0_i32 : i32, i32
  }
  func.func @transform_1(%arg0: i32) -> (i32, i32) {
    %c0_i32 = arith.constant 0 : i32
    %c0_i32_0 = arith.constant 0 : i32
    return %arg0, %c0_i32 : i32, i32
  }
}

</mosaic_0001>

<llo_original>
// kernel: tpu_custom_call.1
$region0: #{tpu_custom_call.1}
  #allocation0 [shape = 'u32[]', space=smem, size = 0x4, offset = 0x4, fixed_abs, tag = 'smem constant byte address 0x4 - core index']
  #allocation1 [shape = 'u32[144,128]{1,0:T(1,128)}', space=vmem, size = 0x12000, scoped, tag = 'internal scratch']
  %s0 = inlined_call_operand.hbm [shape: f32[75,128], index: 0, kind: input, shape index: {}, may-alias: {0,1}]
  %s1 = inlined_call_operand.hbm [shape: f32[75,128], index: 1, kind: output, shape index: {}, may-alias: {0,1}]
  %s2 = sld [smem:[#allocation0]]
  $region18: #{tpu_custom_call.1} parent=0
    _
  %s4 = ssub.s32 1, %s2
  %s5 = scalar_select 0, %s4, %s2
  $region1: #{tpu_custom_call.1} parent=0
    #allocation2 [shape = 'u8[40960]{0}', space=vmem, size = 0xa000, scoped, tag = 'input window, operand 0, single buffered']
    #allocation3 [shape = 's32[1]{0}', space=sflag, size = 0x4, scoped, tag = 'scoped memory for tpu_custom_call.1']
    #allocation4 [shape = 's32[1]{0}', space=sflag, size = 0x4, scoped, tag = 'scoped memory for tpu_custom_call.1']
    #allocation5 [shape = 'u8[40960]{0}', space=vmem, size = 0xa000, scoped, tag = 'output window, operand 0, single buffered']
    %6 = vsyncpa [#allocation3], 0
    %7 = vsyncpa [#allocation4], 0
    // Predicated region
    $region2: #{tpu_custom_call.1} parent=1 // pred_check
      _
    $region3: #{tpu_custom_call.1} parent=1 // pred_check_branch
      %9 = sbr.rel (0) target = $region5
    $region4: #{tpu_custom_call.1} parent=1 // pred_region
      %s11 = ssub.s32 1280, 1280
      %12 = vsyncadd [#allocation3], %s11
      %s13 = sshll.u32 [#allocation2], 4
      %s14 = int_to_ptr.vmem [resolvable:$true] %s13
      %19 = dma.hbm_to_vmem [thread:$0]  %s0, 1280, %s14, [#allocation3], 128, 128, 8
    $region5: #{tpu_custom_call.1} parent=1 // pred_fallthru
      _
    // Predicated region
    $region6: #{tpu_custom_call.1} parent=1 // pred_check
      _
    $region7: #{tpu_custom_call.1} parent=1 // pred_check_branch
      %21 = sbr.rel (0) target = $region9
    $region8: #{tpu_custom_call.1} parent=1 // pred_region
      %22 = dma.done [#allocation3], 1280
    $region9: #{tpu_custom_call.1} parent=1 // pred_fallthru
      _
    %v23 = vld [vmem:[#allocation2] sm:$0xff]
    %v24 = vld [vmem:[#allocation2 + $0x8] sm:$0xff]
    %v25 = vld [vmem:[#allocation2 + $0x10] sm:$0xff]
    %v26 = vld [vmem:[#allocation2 + $0x18] sm:$0xff]
    %v27 = vld [vmem:[#allocation2 + $0x20] sm:$0xff]
    %v28 = vld [vmem:[#allocation2 + $0x28] sm:$0xff]
    %v29 = vld [vmem:[#allocation2 + $0x30] sm:$0xff]
    %v30 = vld [vmem:[#allocation2 + $0x38] sm:$0xff]
    %v31 = vld [vmem:[#allocation2 + $0x40] sm:$0xff]
    %v32 = vld [vmem:[#allocation2 + $0x48] sm:$0x7]
    %v33 = vmin.f32 %v23, 20.0
    %v34 = vmin.f32 %v24, 20.0
    %v35 = vmin.f32 %v25, 20.0
    %v36 = vmin.f32 %v26, 20.0
    %v37 = vmin.f32 %v27, 20.0
    %v38 = vmin.f32 %v28, 20.0
    %v39 = vmin.f32 %v29, 20.0
    %v40 = vmin.f32 %v30, 20.0
    %v41 = vmin.f32 %v31, 20.0
    %v42 = vmin.f32 %v32, 20.0
    %v43 = vmul.f32 %v33, 1.442695
    %v44 = vpow.pop %v43
    %v45 = vmul.f32 %v34, 1.442695
    %v46 = vpow.pop %v45
    %v47 = vmul.f32 %v35, 1.442695
    %v48 = vpow.pop %v47
    %v49 = vmul.f32 %v36, 1.442695
    %v50 = vpow.pop %v49
    %v51 = vmul.f32 %v37, 1.442695
    %v52 = vpow.pop %v51
    %v53 = vmul.f32 %v38, 1.442695
    %v54 = vpow.pop %v53
    %v55 = vmul.f32 %v39, 1.442695
    %v56 = vpow.pop %v55
    %v57 = vmul.f32 %v40, 1.442695
    %v58 = vpow.pop %v57
    %v59 = vmul.f32 %v41, 1.442695
    %v60 = vpow.pop %v59
    %v61 = vmul.f32 %v42, 1.442695
    %v62 = vpow.pop %v61
    %v63 = vadd.f32 %v44, 2.0
    %v64 = vadd.f32 %v46, 2.0
    %v65 = vadd.f32 %v48, 2.0
    %v66 = vadd.f32 %v50, 2.0
    %v67 = vadd.f32 %v52, 2.0
    %v68 = vadd.f32 %v54, 2.0
    %v69 = vadd.f32 %v56, 2.0
    %v70 = vadd.f32 %v58, 2.0
    %v71 = vadd.f32 %v60, 2.0
    %v72 = vadd.f32 %v62, 2.0
    %v73 = vmul.f32 %v44, %v63
    %v74 = vmul.f32 %v46, %v64
    %v75 = vmul.f32 %v48, %v65
    %v76 = vmul.f32 %v50, %v66
    %v77 = vmul.f32 %v52, %v67
    %v78 = vmul.f32 %v54, %v68
    %v79 = vmul.f32 %v56, %v69
    %v80 = vmul.f32 %v58, %v70
    %v81 = vmul.f32 %v60, %v71
    %v82 = vmul.f32 %v62, %v72
    %v83 = vadd.f32 %v73, 2.0
    %v84 = vadd.f32 %v74, 2.0
    %v85 = vadd.f32 %v75, 2.0
    %v86 = vadd.f32 %v76, 2.0
    %v87 = vadd.f32 %v77, 2.0
    %v88 = vadd.f32 %v78, 2.0
    %v89 = vadd.f32 %v79, 2.0
    %v90 = vadd.f32 %v80, 2.0
    %v91 = vadd.f32 %v81, 2.0
    %v92 = vadd.f32 %v82, 2.0
    %v93 = vmul.f32 %v23, %v73
    %v94 = vmul.f32 %v24, %v74
    %v95 = vmul.f32 %v25, %v75
    %v96 = vmul.f32 %v26, %v76
    %v97 = vmul.f32 %v27, %v77
    %v98 = vmul.f32 %v28, %v78
    %v99 = vmul.f32 %v29, %v79
    %v100 = vmul.f32 %v30, %v80
    %v101 = vmul.f32 %v31, %v81
    %v102 = vmul.f32 %v32, %v82
    %v103 = vrcp.pop %v83
    %v104 = vmul.f32 %v93, %v103
    %v105 = vrcp.pop %v84
    %v106 = vmul.f32 %v94, %v105
    %v107 = vrcp.pop %v85
    %v108 = vmul.f32 %v95, %v107
    %v109 = vrcp.pop %v86
    %v110 = vmul.f32 %v96, %v109
    %v111 = vrcp.pop %v87
    %v112 = vmul.f32 %v97, %v111
    %v113 = vrcp.pop %v88
    %v114 = vmul.f32 %v98, %v113
    %v115 = vrcp.pop %v89
    %v116 = vmul.f32 %v99, %v115
    %v117 = vrcp.pop %v90
    %v118 = vmul.f32 %v100, %v117
    %v119 = vrcp.pop %v91
    %v120 = vmul.f32 %v101, %v119
    %v121 = vrcp.pop %v92
    %v122 = vmul.f32 %v102, %v121
    %123 = vst [vmem:[#allocation5] sm:$0xff] %v104
    %124 = vst [vmem:[#allocation5 + $0x8] sm:$0xff] %v106
    %125 = vst [vmem:[#allocation5 + $0x10] sm:$0xff] %v108
    %126 = vst [vmem:[#allocation5 + $0x18] sm:$0xff] %v110
    %127 = vst [vmem:[#allocation5 + $0x20] sm:$0xff] %v112
    %128 = vst [vmem:[#allocation5 + $0x28] sm:$0xff] %v114
    %129 = vst [vmem:[#allocation5 + $0x30] sm:$0xff] %v116
    %130 = vst [vmem:[#allocation5 + $0x38] sm:$0xff] %v118
    %131 = vst [vmem:[#allocation5 + $0x40] sm:$0xff] %v120
    %132 = vst [vmem:[#allocation5 + $0x48] sm:$0x7] %v122
    // Predicated region
    $region10: #{tpu_custom_call.1} parent=1 // pred_check
      _
    $region11: #{tpu_custom_call.1} parent=1 // pred_check_branch
      %134 = sbr.rel (0) target = $region13
    $region12: #{tpu_custom_call.1} parent=1 // pred_region
      %s136 = ssub.s32 1280, 1280
      %137 = vsyncadd [#allocation4], %s136
      %s138 = sshll.u32 [#allocation5], 4
      %s139 = int_to_ptr.vmem [resolvable:$true] %s138
      %144 = dma.vmem_to_hbm [thread:$0]  %s139, 1280, %s1, [#allocation4], 128, 128, 8
    $region13: #{tpu_custom_call.1} parent=1 // pred_fallthru
      _
    // Predicated region
    $region14: #{tpu_custom_call.1} parent=1 // pred_check
      _
    $region15: #{tpu_custom_call.1} parent=1 // pred_check_branch
      %146 = sbr.rel (0) target = $region17
    $region16: #{tpu_custom_call.1} parent=1 // pred_region
      %147 = dma.done [#allocation4], 1280
    $region17: #{tpu_custom_call.1} parent=1 // pred_fallthru
      _
    %148 = vsyncpa [#allocation3], 1
    %149 = vsyncpa [#allocation4], 1

</llo_original>
